<compile_context>
chip_gen: v7x
topology: tpu7x:2x2x1
jax: 0.10.0
libtpu: 0.0.40
codegen_flags: <defaults>
</compile_context>

<pallas_src>
import functools
import math
import numpy as np

import jax
import jax.numpy as jnp
from jax.experimental import pallas as pl
from jax.experimental.pallas import tpu as pltpu


# ---------------------------------------------------------------------------
# Host-side (init-time) real-spherical-harmonic CG tabulation
# ---------------------------------------------------------------------------

def clebsch_gordan(j1, m1, j2, m2, j, m):
    """Racah formula for <j1 m1 j2 m2 | j m> (integer angular momenta)."""
    if m1 + m2 != m:
        return 0.0
    if j < abs(j1 - j2) or j > j1 + j2:
        return 0.0
    if abs(m1) > j1 or abs(m2) > j2 or abs(m) > j:
        return 0.0
    f = math.factorial
    pre = math.sqrt(
        (2 * j + 1)
        * f(j1 + j2 - j) * f(j1 - j2 + j) * f(-j1 + j2 + j)
        / f(j1 + j2 + j + 1)
    )
    pre *= math.sqrt(
        f(j1 + m1) * f(j1 - m1) * f(j2 + m2) * f(j2 - m2) * f(j + m) * f(j - m)
    )
    kmin = max(0, j2 - j - m1, j1 - j + m2)
    kmax = min(j1 + j2 - j, j1 - m1, j2 + m2)
    s = 0.0
    for k in range(kmin, kmax + 1):
        s += (-1.0) ** k / (
            f(k) * f(j1 + j2 - j - k) * f(j1 - m1 - k) * f(j2 + m2 - k)
            * f(j - j2 + m1 + k) * f(j - j1 - m2 + k)
        )
    return pre * s


def csh_to_rsh(j):
    """Unitary transform complex -> real spherical harmonics (torch_gauge convention)."""
    mat = np.zeros((2 * j + 1, 2 * j + 1), dtype=np.complex128)
    for m in range(-j, j + 1):
        if m < 0:
            mat[j + m, j + m] = 1j / math.sqrt(2)
            mat[j - m, j + m] = -1j * (-1) ** m / math.sqrt(2)
        elif m == 0:
            mat[j, j] = 1.0
        else:
            mat[j + m, j + m] = (-1) ** m / math.sqrt(2)
            mat[j - m, j + m] = 1.0 / math.sqrt(2)
    return mat


def cg_compactify(coeffs, j1, j2, j):
    ones = np.ones_like(coeffs)
    j1s = np.arange(-j1, j1 + 1).reshape(2 * j1 + 1, 1, 1) * ones
    j2s = np.arange(-j2, j2 + 1).reshape(1, 2 * j2 + 1, 1) * ones
    js = np.arange(-j, j + 1).reshape(1, 1, 2 * j + 1) * ones
    mask = np.abs(coeffs) > 1e-12
    return np.stack([j1s[mask], j2s[mask], js[mask], coeffs[mask]], axis=0)


def get_rsh_cg_coefficients(j1, j2, j):
    csh_cg = np.zeros((2 * j1 + 1, 2 * j2 + 1, 2 * j + 1), dtype=np.float64)
    for m1 in range(-j1, j1 + 1):
        for m2 in range(-j2, j2 + 1):
            if m1 + m2 < -j or m1 + m2 > j:
                continue
            csh_cg[j1 + m1, j2 + m2, j + m1 + m2] = clebsch_gordan(
                j1, m1, j2, m2, j, m1 + m2)
    phase = {0: 1.0 + 0j, 1: -1j, 2: -1.0 + 0j, 3: 1j}[(j1 + j2 + j) % 4]
    rsh_cg = np.einsum(
        "abc,ai,bj,ck->ijk",
        csh_cg.astype(np.complex128),
        csh_to_rsh(j1), csh_to_rsh(j2), csh_to_rsh(j).conj(),
    ) * phase
    assert np.allclose(rsh_cg.imag, 0.0, atol=1e-10)
    return cg_compactify(rsh_cg.real, j1, j2, j)


# ---------------------------------------------------------------------------
# CGCoupler._init_params reproduced in numpy (builds the coupling tables)
# ---------------------------------------------------------------------------

class CGCouplerTables:
    pass


def build_cg_coupler(metadata_1, metadata_2, max_l, parity=0,
                     overlap_out=True, trunc_in=True):
    metadata_1 = np.asarray(metadata_1, dtype=np.int64)
    metadata_2 = np.asarray(metadata_2, dtype=np.int64)
    assert metadata_1.ndim == 1 and metadata_2.ndim == 1
    in_size1, in_size2 = metadata_1.shape[0], metadata_2.shape[0]
    in_size = max(in_size1, in_size2)
    max_l = min(max_l, in_size1 + in_size2 - 2)
    n_irreps_per_l = np.arange(in_size) * 2 + 1

    if in_size1 < in_size2:
        metadata_1 = np.concatenate(
            [metadata_1, np.zeros(in_size2 - in_size1, np.int64)])
    elif in_size1 > in_size2:
        metadata_2 = np.concatenate(
            [metadata_2, np.zeros(in_size1 - in_size2, np.int64)])
    metadata_in = np.stack([metadata_1, metadata_2], axis=0)

    repid_offsets_in = np.cumsum(metadata_in * n_irreps_per_l[None, :], axis=1)
    repid_offsets_in = np.concatenate(
        [np.zeros((2, 1), np.int64), repid_offsets_in[:, :-1]], axis=1)

    # NOTE: reference code allocates torch.zeros(self.max_l) which is inconsistent
    # with the lout loop; use max_l + 1 (the functional intent).
    max_n_out = np.zeros(max_l + 1, dtype=np.int64)
    m = min(in_size, max_l + 1)
    max_n_out[:m] = np.maximum(metadata_1, metadata_2)[:m]
    if max_l + 1 > in_size:
        max_n_out[in_size:] = max_n_out[in_size - 1]

    metadata_out = np.zeros_like(max_n_out)
    valid_coupling_ids = []
    for lout in range(max_l + 1):
        for lin1 in range(in_size1):
            for lin2 in range(in_size2):
                coupling_parity = (-1) ** (lout + lin1 + lin2)
                if parity != 0 and parity != coupling_parity:
                    continue
                if lin1 + lin2 < lout or abs(lin1 - lin2) > lout:
                    continue
                if trunc_in:
                    if lin1 + lin2 > max_l:
                        continue
                    degeneracy = int(min(metadata_in[0, lin1], metadata_in[1, lin2],
                                         max_n_out[lin1 + lin2]))
                else:
                    degeneracy = int(min(metadata_in[0, lin1], metadata_in[1, lin2],
                                         max_n_out[lout]))
                if not overlap_out:
                    metadata_out[lout] += degeneracy
                elif degeneracy > metadata_out[lout]:
                    metadata_out[lout] = degeneracy
                if degeneracy > 0:
                    valid_coupling_ids.append((lout, lin1, lin2, degeneracy))

    n_irreps_out = np.arange(max_l + 1) * 2 + 1
    repid_offsets_out = np.cumsum(metadata_out * n_irreps_out)
    repid_offsets_out = np.concatenate([np.zeros(1, np.int64),
                                        repid_offsets_out[:-1]])

    cg_tilde, repids_in1, repids_in2, repids_out = [], [], [], []
    out_ns_offset, lout_last = 0, 0
    for lout, lin1, lin2, degeneracy in valid_coupling_ids:
        if lout > lout_last:
            out_ns_offset = 0
        cg_source = get_rsh_cg_coefficients(lin1, lin2, lout)   # (4, nnz)
        cg_segment = np.repeat(cg_source, degeneracy, axis=1)   # repeat_interleave dim=1
        ns_segment = np.tile(np.arange(degeneracy), cg_source.shape[1])
        repids_in1_3j = (repid_offsets_in[0, lin1]
                         + (cg_segment[0].astype(np.int64) + lin1) * metadata_in[0, lin1]
                         + ns_segment)
        repids_in2_3j = (repid_offsets_in[1, lin2]
                         + (cg_segment[1].astype(np.int64) + lin2) * metadata_in[1, lin2]
                         + ns_segment)
        repids_out_3j = (repid_offsets_out[lout]
                         + (cg_segment[2].astype(np.int64) + lout) * metadata_out[lout]
                         + out_ns_offset + ns_segment)
        cg_tilde.append(cg_segment[3])
        repids_in1.append(repids_in1_3j)
        repids_in2.append(repids_in2_3j)
        repids_out.append(repids_out_3j)
        if not overlap_out:
            out_ns_offset += degeneracy
        lout_last = lout

    tabs = CGCouplerTables()
    tabs.cg_tilde = np.concatenate(cg_tilde).astype(np.float32)
    tabs.repids_in1 = np.concatenate(repids_in1).astype(np.int64)
    tabs.repids_in2 = np.concatenate(repids_in2).astype(np.int64)
    tabs.repids_out = np.concatenate(repids_out).astype(np.int64)
    tabs.metadata_in1 = metadata_in[0]
    tabs.metadata_in2 = metadata_in[1]
    tabs.metadata_out = metadata_out
    tabs.dim_in1 = int(np.sum(metadata_in[0] * n_irreps_per_l))
    tabs.dim_in2 = int(np.sum(metadata_in[1] * n_irreps_per_l))
    tabs.dim_out = int(np.sum(metadata_out * n_irreps_out))   # == out_layout.shape[1]
    return tabs


# ---------------------------------------------------------------------------
# Host-side dense operands (lane-padded, cg folded into scatter, fused gather)
# ---------------------------------------------------------------------------

def _round_up(x, m):
    return ((x + m - 1) // m) * m


def build_dense_operands(tabs, lane=128):
    """Padded one-hot gather / cg-scaled scatter matrices: pure MXU work in-kernel."""
    K = int(tabs.cg_tilde.shape[0])
    d1, d2, dout = tabs.dim_in1, tabs.dim_in2, tabs.dim_out
    d12_pad = _round_up(d1 + d2, lane)
    K_pad = _round_up(K, lane)
    dout_pad = _round_up(dout, lane)

    # Fused block-gather:  [x1 | x2 | 0] (B, d12_pad) @ G (d12_pad, 2*K_pad)
    #   -> [x1_tilde | x2_tilde]  (index_select semantics, one-hot columns)
    G = np.zeros((d12_pad, 2 * K_pad), np.float32)
    G[tabs.repids_in1, np.arange(K)] = 1.0
    G[d1 + tabs.repids_in2, K_pad + np.arange(K)] = 1.0

    # Scatter-add with cg_tilde folded in:  prod (B, K_pad) @ S (K_pad, dout_pad)
    #   == zeros().index_add_(repids_out, x1_tilde * x2_tilde * cg_tilde)
    S = np.zeros((K_pad, dout_pad), np.float32)
    S[np.arange(K), tabs.repids_out] = tabs.cg_tilde

    dims = dict(d1=d1, d2=d2, dout=dout, K=K,
                d12_pad=d12_pad, K_pad=K_pad, dout_pad=dout_pad)
    return G, S, dims


# ---------------------------------------------------------------------------
# Pallas TPU kernel: fused gather -> product -> scatter-add (all MXU)
# ---------------------------------------------------------------------------

def cg_couple_kernel(x12_ref, g_ref, s_ref, o_ref, *, k_pad):
    # (tb, d12_pad) @ (d12_pad, 2*K_pad) -> (tb, 2*K_pad)  [bf16 x bf16 -> f32 acc]
    xt = jnp.dot(x12_ref[...], g_ref[...], preferred_element_type=jnp.float32)
    # Lane-aligned static split (k_pad is a multiple of 128): [x1_tilde | x2_tilde].
    prod = xt[:, :k_pad] * xt[:, k_pad:]                      # (tb, K_pad) f32 on VPU
    # (tb, K_pad) @ (K_pad, dout_pad) -> (tb, dout_pad); cg already folded into S (f32).
    o_ref[...] = jnp.dot(prod, s_ref[...],
                         preferred_element_type=jnp.float32).astype(o_ref.dtype)


def cg_couple(x1, x2, G, S, dims, *, tb=256, matmul_dtype=jnp.bfloat16):
    B = x1.shape[0]
    d1, d2, dout = dims["d1"], dims["d2"], dims["dout"]
    d12_pad, K_pad, dout_pad = dims["d12_pad"], dims["K_pad"], dims["dout_pad"]

    # Batch tile: large (MXU-row friendly), but never bigger than the (padded) batch.
    tb = max(16, min(tb, _round_up(B, 16)))
    B_pad = _round_up(B, tb)
    grid = (B_pad // tb,)

    # Host-side layout plumbing: concat + zero-pad inputs to one lane-dense slab,
    # cast gather operands to bf16 (the one-hot gather matrix is exact in bf16).
    x12 = jnp.concatenate(
        [x1.astype(matmul_dtype), x2.astype(matmul_dtype)], axis=1)
    x12 = jnp.pad(x12, ((0, B_pad - B), (0, d12_pad - (d1 + d2))))
    G = G.astype(matmul_dtype)
    S = S.astype(jnp.float32)          # keep CG coefficients at full f32 precision

    # Cost / VMEM accounting (G and S stay resident; batch tile double-buffered).
    itemsize = 2 if matmul_dtype == jnp.bfloat16 else 4
    flops = 2 * B_pad * d12_pad * (2 * K_pad) + 2 * B_pad * K_pad * dout_pad
    bytes_accessed = int(
        B_pad * d12_pad * itemsize               # x12 (streamed)
        + d12_pad * 2 * K_pad * itemsize         # G (resident)
        + K_pad * dout_pad * 4                   # S (resident, f32)
        + B_pad * dout_pad * 4                   # output (f32)
    )
    vmem_bytes = int(
        2 * tb * d12_pad * itemsize              # x12 tile, double-buffered
        + 2 * tb * dout_pad * 4                  # out tile, double-buffered
        + d12_pad * 2 * K_pad * itemsize         # G
        + K_pad * dout_pad * 4                   # S
        + tb * (2 * K_pad + K_pad) * 4           # xt + prod intermediates
    )
    vmem_limit = min(max(2 * vmem_bytes, 4 << 20), 96 << 20)

    out = pl.pallas_call(
        functools.partial(cg_couple_kernel, k_pad=K_pad),
        out_shape=jax.ShapeDtypeStruct((B_pad, dout_pad), jnp.float32),
        grid_spec=pl.GridSpec(
            grid=grid,
            in_specs=[
                pl.BlockSpec((tb, d12_pad), lambda i: (i, 0)),        # [x1|x2] batch tile
                pl.BlockSpec((d12_pad, 2 * K_pad), lambda i: (0, 0)), # fused gather (resident)
                pl.BlockSpec((K_pad, dout_pad), lambda i: (0, 0)),    # cg-scaled scatter (resident)
            ],
            out_specs=pl.BlockSpec((tb, dout_pad), lambda i: (i, 0)),
        ),
        compiler_params=pltpu.CompilerParams(
            dimension_semantics=("parallel",),
            vmem_limit_bytes=vmem_limit,
        ),
        cost_estimate=pl.CostEstimate(flops=flops, transcendentals=0,
                                      bytes_accessed=bytes_accessed),
    )(x12, G, S)

    # Slice off the batch / lane padding.
    return out[:B, :dout]


# ---------------------------------------------------------------------------

if __name__ == "__main__":
    # Small SphericalTensor metadata (nl=3):  dims -> x1: 23, x2: 19
    metadata_1 = [4, 3, 2]
    metadata_2 = [3, 2, 2]
    max_l = 2

    tabs = build_cg_coupler(metadata_1, metadata_2, max_l,
                            parity=0, overlap_out=True, trunc_in=True)
    G_np, S_np, dims = build_dense_operands(tabs)

    # Batch sized so the grid has 2 steps of 128 MXU rows each (exercises the
    # parallel grid / both v7x TensorCores while staying small).
    B, tb = 256, 128
    key = jax.random.PRNGKey(0)
    k1, k2 = jax.random.split(key)
    x1 = jax.random.normal(k1, (B, tabs.dim_in1), dtype=jnp.float32)
    x2 = jax.random.normal(k2, (B, tabs.dim_in2), dtype=jnp.float32)

    out = cg_couple(x1, x2, jnp.asarray(G_np), jnp.asarray(S_np), dims, tb=tb)
    out = jax.block_until_ready(out)

    # Pure-numpy reference with the exact torch semantics
    # (index_select -> elementwise -> zeros().index_add_), in float64.
    x1_np = np.asarray(x1, dtype=np.float64)
    x2_np = np.asarray(x2, dtype=np.float64)
    prod = (x1_np[:, tabs.repids_in1] * x2_np[:, tabs.repids_in2]
            * tabs.cg_tilde[None, :].astype(np.float64))
    ref = np.zeros((B, tabs.dim_out), dtype=np.float64)
    idx_b = np.broadcast_to(np.arange(B)[:, None], prod.shape)
    idx_o = np.broadcast_to(tabs.repids_out[None, :], prod.shape)
    np.add.at(ref, (idx_b, idx_o), prod)

    # bf16 gather operands + f32 accumulation: expected relative error ~3e-3.
    rel_err = np.linalg.norm(np.asarray(out, np.float64) - ref) / np.linalg.norm(ref)
    assert out.shape == (B, tabs.dim_out)
    assert rel_err < 1e-2, f"relative error too large: {rel_err}"
    print("KERNEL_OK")
</pallas_src>

<mosaic_0001>
module attributes {stable_mosaic.version = 11 : i64} {
  func.func @cg_couple_kernel(%arg0: i32, %arg1: memref<128x128xbf16, #tpu.memory_space<vmem>>, %arg2: memref<128x256xbf16, #tpu.memory_space<vmem>>, %arg3: memref<128x128xf32, #tpu.memory_space<vmem>>, %arg4: memref<128x128xf32, #tpu.memory_space<vmem>>) attributes {dimension_semantics = [#tpu.dimension_semantics<parallel>], iteration_bounds = array<i64: 2>, scalar_prefetch = 0 : i64, scratch_operands = 0 : i64, tpu.core_type = #tpu.core_type<tc>, window_params = [{transform_indices = @transform_0, window_bounds = array<i64: 128, 128>}, {pipeline_mode = #tpu.pipeline_mode<synchronous>, transform_indices = @transform_1, window_bounds = array<i64: 128, 256>}, {pipeline_mode = #tpu.pipeline_mode<synchronous>, transform_indices = @transform_2, window_bounds = array<i64: 128, 128>}, {transform_indices = @transform_3, window_bounds = array<i64: 128, 128>}]} {
    %c0 = arith.constant 0 : index
    %c0_0 = arith.constant 0 : index
    %0 = vector.load %arg1[%c0, %c0_0] : memref<128x128xbf16, #tpu.memory_space<vmem>>, vector<128x128xbf16>
    %c0_1 = arith.constant 0 : index
    %c0_2 = arith.constant 0 : index
    %1 = vector.load %arg2[%c0_1, %c0_2] : memref<128x256xbf16, #tpu.memory_space<vmem>>, vector<128x256xbf16>
    %cst = arith.constant dense<0.000000e+00> : vector<128x256xf32>
    %2 = tpu.matmul %0, %1, %cst {dimension_numbers = #tpu.dot_dimension_numbers<[1], [0], [0], [1], [0, 0, 1, 1], [], []>} : vector<128x128xbf16>, vector<128x256xbf16>, vector<128x256xf32> -> vector<128x256xf32>
    %3 = vector.extract_strided_slice %2 {offsets = [0, 0], sizes = [128, 128], strides = [1, 1]} : vector<128x256xf32> to vector<128x128xf32>
    %4 = vector.extract_strided_slice %2 {offsets = [0, 128], sizes = [128, 128], strides = [1, 1]} : vector<128x256xf32> to vector<128x128xf32>
    %5 = arith.mulf %3, %4 : vector<128x128xf32>
    %c0_3 = arith.constant 0 : index
    %c0_4 = arith.constant 0 : index
    %6 = vector.load %arg3[%c0_3, %c0_4] : memref<128x128xf32, #tpu.memory_space<vmem>>, vector<128x128xf32>
    %cst_5 = arith.constant dense<0.000000e+00> : vector<128x128xf32>
    %7 = tpu.matmul %5, %6, %cst_5 {dimension_numbers = #tpu.dot_dimension_numbers<[1], [0], [0], [1], [0, 0, 1, 1], [], []>} : vector<128x128xf32>, vector<128x128xf32>, vector<128x128xf32> -> vector<128x128xf32>
    %c0_6 = arith.constant 0 : index
    %c0_7 = arith.constant 0 : index
    %8 = vector.load %arg4[%c0_6, %c0_7] : memref<128x128xf32, #tpu.memory_space<vmem>>, vector<128x128xf32>
    tpu.vector_store %arg4[%c0_6, %c0_7], %7 {strides = array<i32>} : memref<128x128xf32, #tpu.memory_space<vmem>>, vector<128x128xf32>,
    return
  }
  func.func @transform_0(%arg0: i32) -> (i32, i32) {
    %c0_i32 = arith.constant 0 : i32
    %c0_i32_0 = arith.constant 0 : i32
    return %arg0, %c0_i32 : i32, i32
  }
  func.func @transform_1(%arg0: i32) -> (i32, i32) {
    %c0_i32 = arith.constant 0 : i32
    %c0_i32_0 = arith.constant 0 : i32
    %c0_i32_1 = arith.constant 0 : i32
    return %c0_i32, %c0_i32_0 : i32, i32
  }
  func.func @transform_2(%arg0: i32) -> (i32, i32) {
    %c0_i32 = arith.constant 0 : i32
    %c0_i32_0 = arith.constant 0 : i32
    %c0_i32_1 = arith.constant 0 : i32
    return %c0_i32, %c0_i32_0 : i32, i32
  }
  func.func @transform_3(%arg0: i32) -> (i32, i32) {
    %c0_i32 = arith.constant 0 : i32
    %c0_i32_0 = arith.constant 0 : i32
    return %arg0, %c0_i32 : i32, i32
  }
}

</mosaic_0001>

<llo_original>
// kernel: tpu_custom_call.1
$region0: #{tpu_custom_call.1}
  #allocation0 [shape = 'u32[]', space=smem, size = 0x4, offset = 0x4, fixed_abs, tag = 'smem constant byte address 0x4 - core index']
  #allocation1 [shape = 'u32[144,128]{1,0:T(1,128)}', space=vmem, size = 0x12000, scoped, tag = 'internal scratch']
  %s0 = inlined_call_operand.hbm [shape: bf16[256,128], index: 0, kind: input, shape index: {}]
  %s1 = inlined_call_operand.hbm [shape: bf16[128,256], index: 1, kind: input, shape index: {}]
  %s2 = inlined_call_operand.hbm [shape: f32[128,128], index: 2, kind: input, shape index: {}]
  %s3 = inlined_call_operand.hbm [shape: f32[256,128], index: 3, kind: output, shape index: {}]
  %s4 = sld [smem:[#allocation0]]
  $region57: #{tpu_custom_call.1} parent=0
    _
  %s6 = ssub.s32 1, %s4
  %s7 = scalar_select 0, %s6, %s4
  $region1: #{tpu_custom_call.1} parent=0
    #allocation2 [shape = 'u8[65536]{0}', space=vmem, size = 0x10000, scoped, tag = 'input window, operand 0']
    #allocation3 [shape = 's32[2]{0}', space=sflag, size = 0x8, scoped, tag = 'scoped memory for tpu_custom_call.1']
    #allocation4 [shape = 's32[2]{0}', space=sflag, size = 0x8, scoped, tag = 'scoped memory for tpu_custom_call.1']
    #allocation5 [shape = 'u8[65536]{0}', space=vmem, size = 0x10000, scoped, tag = 'input window, operand 1, single buffered']
    #allocation6 [shape = 's32[1]{0}', space=sflag, size = 0x4, scoped, tag = 'scoped memory for tpu_custom_call.1']
    #allocation7 [shape = 'u8[65536]{0}', space=vmem, size = 0x10000, scoped, tag = 'input window, operand 2, single buffered']
    #allocation8 [shape = 'u8[131072]{0}', space=vmem, size = 0x20000, scoped, tag = 'output window, operand 0']
    %8 = vsyncpa [#allocation3], 0
    %s9 = scalar_lea.sflag [#allocation3], 1
    %10 = vsyncpa %s9, 0
    %11 = vsyncpa [#allocation6], 0
    %12 = vsyncpa [#allocation4], 0
    %s13 = scalar_lea.sflag [#allocation4], 1
    %14 = vsyncpa %s13, 0
    loop: start=0, step=1, limit=4
    $region2: #{tpu_custom_call.1} parent=1 // loop_pre_header
      _
    $region3: #{tpu_custom_call.1} parent=1 // loop_header
      %s16 = sphi 0, %s20
      %p17 = scmp.ge.s32.totalorder %s16, 4
      %s26 = sphi 0, %s28
      %s29 = sphi 0, %s26
      %s30 = sphi 0, %s29
      %s46 = sphi 0, %s30
      %s50 = sphi 0, %s50
      %s52 = sphi 0, %s50
      %s53 = sphi 0, %s52
      %s67 = sphi 0, %s53
      %s71 = sphi 0, %s71
      %s73 = sphi 0, %s71
      %s74 = sphi 0, %s73
      %s88 = sphi 0, %s74
      %s94 = sphi 0, %s96
      %s97 = sphi 0, %s94
      %s98 = sphi 0, %s97
      %s114 = sphi 0, %s98
    $region4: #{tpu_custom_call.1} parent=1 // loop_header_branch
      %19 = sbr.rel (%p17) target = $region8
    $region5: #{tpu_custom_call.1} parent=1 // loop_body
      %s21 = ssub.s32 %s16, 1
      %s22 = ssub.s32 %s16, 2
      %s23 = sadd.s32 %s16, 1
      %s24 = ssub.s32 %s16, %s23
      %p25 = scmp.eq.s32.totalorder %s24, 0
      %s27 = sadd.s32 %s26, 1
      %s28 = scalar_select %p25, %s26, %s27
      %p31 = pneg %p25
      %p32 = scmp.eq.s32.totalorder %s16, 1
      %p33 = por %p31, %p32
      %p34 = scmp.ne.s32.totalorder %s26, %s29
      %p35 = scmp.eq.s32.totalorder %s16, 0
      %p36 = por %p34, %p35
      %p37 = scmp.ne.s32.totalorder %s26, %s29
      %p38 = scmp.eq.s32.totalorder %s21, 1
      %p39 = por %p37, %p38
      %p40 = scmp.ne.s32.totalorder %s29, %s30
      %p41 = scmp.eq.s32.totalorder %s21, 0
      %p42 = por %p40, %p41
      %p43 = scmp.ne.s32.totalorder %s29, %s30
      %p44 = scmp.eq.s32.totalorder %s22, 1
      %p45 = por %p43, %p44
      %p47 = scmp.ne.s32.totalorder %s30, %s46
      %p48 = scmp.eq.s32.totalorder %s22, 0
      %p49 = por %p47, %p48
      %s51 = sadd.s32 %s50, 1
      %p54 = scmp.eq.s32.totalorder %s16, 1
      %p55 = scmp.ne.s32.totalorder %s50, %s52
      %p56 = scmp.eq.s32.totalorder %s16, 0
      %p57 = por %p55, %p56
      %p58 = scmp.ne.s32.totalorder %s50, %s52
      %p59 = scmp.eq.s32.totalorder %s21, 1
      %p60 = por %p58, %p59
      %p61 = scmp.ne.s32.totalorder %s52, %s53
      %p62 = scmp.eq.s32.totalorder %s21, 0
      %p63 = por %p61, %p62
      %p64 = scmp.ne.s32.totalorder %s52, %s53
      %p65 = scmp.eq.s32.totalorder %s22, 1
      %p66 = por %p64, %p65
      %p68 = scmp.ne.s32.totalorder %s53, %s67
      %p69 = scmp.eq.s32.totalorder %s22, 0
      %p70 = por %p68, %p69
      %s72 = sadd.s32 %s71, 1
      %p75 = scmp.eq.s32.totalorder %s16, 1
      %p76 = scmp.ne.s32.totalorder %s71, %s73
      %p77 = scmp.eq.s32.totalorder %s16, 0
      %p78 = por %p76, %p77
      %p79 = scmp.ne.s32.totalorder %s71, %s73
      %p80 = scmp.eq.s32.totalorder %s21, 1
      %p81 = por %p79, %p80
      %p82 = scmp.ne.s32.totalorder %s73, %s74
      %p83 = scmp.eq.s32.totalorder %s21, 0
      %p84 = por %p82, %p83
      %p85 = scmp.ne.s32.totalorder %s73, %s74
      %p86 = scmp.eq.s32.totalorder %s22, 1
      %p87 = por %p85, %p86
      %p89 = scmp.ne.s32.totalorder %s74, %s88
      %p90 = scmp.eq.s32.totalorder %s22, 0
      %p91 = por %p89, %p90
      %s92 = ssub.s32 %s16, %s23
      %p93 = scmp.eq.s32.totalorder %s92, 0
      %s95 = sadd.s32 %s94, 1
      %s96 = scalar_select %p93, %s94, %s95
      %p99 = pneg %p93
      %p100 = scmp.eq.s32.totalorder %s16, 1
      %p101 = por %p99, %p100
      %p102 = scmp.ne.s32.totalorder %s94, %s97
      %p103 = scmp.eq.s32.totalorder %s16, 0
      %p104 = por %p102, %p103
      %p105 = scmp.ne.s32.totalorder %s94, %s97
      %p106 = scmp.eq.s32.totalorder %s21, 1
      %p107 = por %p105, %p106
      %p108 = scmp.ne.s32.totalorder %s97, %s98
      %p109 = scmp.eq.s32.totalorder %s21, 0
      %p110 = por %p108, %p109
      %p111 = scmp.ne.s32.totalorder %s97, %s98
      %p112 = scmp.eq.s32.totalorder %s22, 1
      %p113 = por %p111, %p112
      %p115 = scmp.ne.s32.totalorder %s98, %s114
      %p116 = scmp.eq.s32.totalorder %s22, 0
      %p117 = por %p115, %p116
      %p118 = scmp.le.s32.totalorder 1, %s16
      %p119 = scmp.lt.s32.totalorder %s16, 3
      %p120 = pnand %p118, %p119
      %p121 = pneg %p120
      // Predicated region
      $region9: #{tpu_custom_call.1} parent=5 // pred_check
        _
      $region10: #{tpu_custom_call.1} parent=5 // pred_check_branch
        %123 = sbr.rel (%p120) target = $region12
      $region11: #{tpu_custom_call.1} parent=5 // pred_region
        %s124 = ssub.s32 %s16, 1
        // Predicated region
        $region13: #{tpu_custom_call.1} parent=11 // pred_check
          %p125 = pneg %p63
        $region14: #{tpu_custom_call.1} parent=11 // pred_check_branch
          %127 = sbr.rel (%p125) target = $region16
        $region15: #{tpu_custom_call.1} parent=11 // pred_region
          %s129 = ssub.s32 2048, 2048
          %130 = vsyncadd [#allocation6], %s129
          %s131 = sshll.u32 [#allocation5], 4
          %s132 = int_to_ptr.vmem [resolvable:$true] %s131
          %137 = dma.hbm_to_vmem [thread:$0]  %s1, 2048, %s132, [#allocation6], 128, 128, 8
        $region16: #{tpu_custom_call.1} parent=11 // pred_fallthru
          _
        // Predicated region
        $region17: #{tpu_custom_call.1} parent=11 // pred_check
          %p138 = pneg %p84
        $region18: #{tpu_custom_call.1} parent=11 // pred_check_branch
          %140 = sbr.rel (%p138) target = $region20
        $region19: #{tpu_custom_call.1} parent=11 // pred_region
          %s142 = ssub.s32 2048, 2048
          %143 = vsyncadd [#allocation6], %s142
          %s144 = sshll.u32 [#allocation7], 4
          %s145 = int_to_ptr.vmem [resolvable:$true] %s144
          %150 = dma.hbm_to_vmem [thread:$0]  %s2, 2048, %s145, [#allocation6], 128, 128, 8
        $region20: #{tpu_custom_call.1} parent=11 // pred_fallthru
          _
      $region12: #{tpu_custom_call.1} parent=5 // pred_fallthru
        _
      %p151 = scmp.lt.s32.totalorder %s16, 2
      // Predicated region
      $region21: #{tpu_custom_call.1} parent=5 // pred_check
        %p152 = pneg %p151
      $region22: #{tpu_custom_call.1} parent=5 // pred_check_branch
        %154 = sbr.rel (%p152) target = $region24
      $region23: #{tpu_custom_call.1} parent=5 // pred_region
        // Predicated region
        $region25: #{tpu_custom_call.1} parent=23 // pred_check
          %p155 = pneg %p36
        $region26: #{tpu_custom_call.1} parent=23 // pred_check_branch
          %157 = sbr.rel (%p155) target = $region28
        $region27: #{tpu_custom_call.1} parent=23 // pred_region
          %s158 = sand.u32 %s26, 1
          %s159 = scalar_lea.sflag [#allocation3], %s158
          %s160 = sand.u32 %s26, 1
          %s161 = smul.addr %s160, 64
          %s162 = scalar_lea.vmem [#allocation2], %s161
          %s163 = smul.u32 16, %s16
          %s165 = ssub.s32 1024, 1024
          %166 = vsyncadd %s159, %s165
          %s167 = smul.addr %s163, 64
          %s168 = scalar_lea.hbm %s0, %s167
          %s169 = sshll.u32 %s162, 4
          %s170 = int_to_ptr.vmem [resolvable:$true] %s169
          %175 = dma.hbm_to_vmem [thread:$0]  %s168, 1024, %s170, %s159, 64, 64, 4
        $region28: #{tpu_custom_call.1} parent=23 // pred_fallthru
          _
      $region24: #{tpu_custom_call.1} parent=5 // pred_fallthru
        _
      %p176 = scmp.le.s32.totalorder 1, %s16
      %p177 = scmp.lt.s32.totalorder %s16, 3
      %p178 = pnand %p176, %p177
      %p179 = pneg %p178
      // Predicated region
      $region29: #{tpu_custom_call.1} parent=5 // pred_check
        _
      $region30: #{tpu_custom_call.1} parent=5 // pred_check_branch
        %181 = sbr.rel (%p178) target = $region32
      $region31: #{tpu_custom_call.1} parent=5 // pred_region
        %s182 = ssub.s32 %s16, 1
        %s183 = sand.u32 %s29, 1
        %s184 = scalar_lea.sflag [#allocation3], %s183
        %s185 = sand.u32 %s29, 1
        %s186 = smul.addr %s185, 64
        %s187 = scalar_lea.vmem [#allocation2], %s186
        // Predicated region
        $region33: #{tpu_custom_call.1} parent=31 // pred_check
          %p188 = pneg %p42
        $region34: #{tpu_custom_call.1} parent=31 // pred_check_branch
          %190 = sbr.rel (%p188) target = $region36
        $region35: #{tpu_custom_call.1} parent=31 // pred_region
          %191 = dma.done %s184, 1024
        $region36: #{tpu_custom_call.1} parent=31 // pred_fallthru
          _
        // Predicated region
        $region37: #{tpu_custom_call.1} parent=31 // pred_check
          %p192 = pneg %p63
        $region38: #{tpu_custom_call.1} parent=31 // pred_check_branch
          %194 = sbr.rel (%p192) target = $region40
        $region39: #{tpu_custom_call.1} parent=31 // pred_region
          %195 = dma.done [#allocation6], 2048
        $region40: #{tpu_custom_call.1} parent=31 // pred_fallthru
          _
        // Predicated region
        $region41: #{tpu_custom_call.1} parent=31 // pred_check
          %p196 = pneg %p84
        $region42: #{tpu_custom_call.1} parent=31 // pred_check_branch
          %198 = sbr.rel (%p196) target = $region44
        $region43: #{tpu_custom_call.1} parent=31 // pred_region
          %199 = dma.done [#allocation6], 2048
        $region44: #{tpu_custom_call.1} parent=31 // pred_fallthru
          _
        %s200 = sand.u32 %s29, 1
        %s201 = scalar_lea.sflag [#allocation3], %s200
        %s202 = sand.u32 %s29, 1
        %s203 = smul.addr %s202, 64
        %s204 = scalar_lea.vmem [#allocation2], %s203
        %p205 = pneg %p42
        %p206 = pneg %p39
        %p207 = pneg %p63
        %p208 = pneg %p60
        %p209 = pneg %p84
        %p210 = pneg %p81
        %p211 = pneg %p110
        %p212 = pneg %p107
        %s213 = sand.u32 %s97, 1
        %s214 = scalar_lea.sflag [#allocation4], %s213
        %s215 = sand.u32 %s97, 1
        %s216 = smul.addr %s215, 128
        %s217 = scalar_lea.vmem [#allocation8], %s216
        %s218 = smul.u32 16, %s21
        %s219 = smul.u32 16, %s21
        %v221 = vld [vmem:[%s187] sm:$0xf]
        %v222 = vld [vmem:[%s187 + $0x4] sm:$0xf]
        %v223 = vld [vmem:[%s187 + $0x8] sm:$0xf]
        %v224 = vld [vmem:[%s187 + $0xc] sm:$0xf]
        %v225 = vld [vmem:[%s187 + $0x10] sm:$0xf]
        %v226 = vld [vmem:[%s187 + $0x14] sm:$0xf]
        %v227 = vld [vmem:[%s187 + $0x18] sm:$0xf]
        %v228 = vld [vmem:[%s187 + $0x1c] sm:$0xf]
        %v229 = vld [vmem:[%s187 + $0x20] sm:$0xf]
        %v230 = vld [vmem:[%s187 + $0x24] sm:$0xf]
        %v231 = vld [vmem:[%s187 + $0x28] sm:$0xf]
        %v232 = vld [vmem:[%s187 + $0x2c] sm:$0xf]
        %v233 = vld [vmem:[%s187 + $0x30] sm:$0xf]
        %v234 = vld [vmem:[%s187 + $0x34] sm:$0xf]
        %v235 = vld [vmem:[%s187 + $0x38] sm:$0xf]
        %v236 = vld [vmem:[%s187 + $0x3c] sm:$0xf]
        %v237 = vld [vmem:[#allocation5] sm:$0xff]
        %v238 = vld [vmem:[#allocation5 + $0x8] sm:$0xff]
        %v239 = vld [vmem:[#allocation5 + $0x10] sm:$0xff]
        %v240 = vld [vmem:[#allocation5 + $0x18] sm:$0xff]
        %v241 = vld [vmem:[#allocation5 + $0x20] sm:$0xff]
        %v242 = vld [vmem:[#allocation5 + $0x28] sm:$0xff]
        %v243 = vld [vmem:[#allocation5 + $0x30] sm:$0xff]
        %v244 = vld [vmem:[#allocation5 + $0x38] sm:$0xff]
        %v245 = vld [vmem:[#allocation5 + $0x40] sm:$0xff]
        %v246 = vld [vmem:[#allocation5 + $0x48] sm:$0xff]
        %v247 = vld [vmem:[#allocation5 + $0x50] sm:$0xff]
        %v248 = vld [vmem:[#allocation5 + $0x58] sm:$0xff]
        %v249 = vld [vmem:[#allocation5 + $0x60] sm:$0xff]
        %v250 = vld [vmem:[#allocation5 + $0x68] sm:$0xff]
        %v251 = vld [vmem:[#allocation5 + $0x70] sm:$0xff]
        %v252 = vld [vmem:[#allocation5 + $0x78] sm:$0xff]
        %v269 = vunpack.c.l.b16 %v221
        %v270 = vunpack.c.l.b16 %v222
        %v271 = vunpack.c.l.b16 %v223
        %v272 = vunpack.c.l.b16 %v224
        %v273 = vunpack.c.l.b16 %v225
        %v274 = vunpack.c.l.b16 %v226
        %v275 = vunpack.c.l.b16 %v227
        %v276 = vunpack.c.l.b16 %v228
        %v277 = vunpack.c.l.b16 %v229
        %v278 = vunpack.c.l.b16 %v230
        %v279 = vunpack.c.l.b16 %v231
        %v280 = vunpack.c.l.b16 %v232
        %v281 = vunpack.c.l.b16 %v233
        %v282 = vunpack.c.l.b16 %v234
        %v283 = vunpack.c.l.b16 %v235
        %v284 = vunpack.c.l.b16 %v236
        %v285 = vpack.c.b16 %v270, %v269
        %v286 = vpack.c.b16 %v272, %v271
        %v287 = vpack.c.b16 %v274, %v273
        %v288 = vpack.c.b16 %v276, %v275
        %v289 = vpack.c.b16 %v278, %v277
        %v290 = vpack.c.b16 %v280, %v279
        %v291 = vpack.c.b16 %v282, %v281
        %v292 = vpack.c.b16 %v284, %v283
        %v317 = vunpack.c.l.b16 %v237
        %v318 = vunpack.c.h.b16 %v237
        %v319 = vunpack.c.l.b16 %v238
        %v320 = vunpack.c.h.b16 %v238
        %v321 = vunpack.c.l.b16 %v239
        %v322 = vunpack.c.h.b16 %v239
        %v323 = vunpack.c.l.b16 %v240
        %v324 = vunpack.c.h.b16 %v240
        %v325 = vunpack.c.l.b16 %v241
        %v326 = vunpack.c.h.b16 %v241
        %v327 = vunpack.c.l.b16 %v242
        %v328 = vunpack.c.h.b16 %v242
        %v329 = vunpack.c.l.b16 %v243
        %v330 = vunpack.c.h.b16 %v243
        %v331 = vunpack.c.l.b16 %v244
        %v332 = vunpack.c.h.b16 %v244
        %v333 = vunpack.c.l.b16 %v245
        %v334 = vunpack.c.h.b16 %v245
        %v335 = vunpack.c.l.b16 %v246
        %v336 = vunpack.c.h.b16 %v246
        %v337 = vunpack.c.l.b16 %v247
        %v338 = vunpack.c.h.b16 %v247
        %v339 = vunpack.c.l.b16 %v248
        %v340 = vunpack.c.h.b16 %v248
        %v341 = vunpack.c.l.b16 %v249
        %v342 = vunpack.c.h.b16 %v249
        %v343 = vunpack.c.l.b16 %v250
        %v344 = vunpack.c.h.b16 %v250
        %v345 = vunpack.c.l.b16 %v251
        %v346 = vunpack.c.h.b16 %v251
        %v347 = vunpack.c.l.b16 %v252
        %v348 = vunpack.c.h.b16 %v252
        %v349 = vpack.c.b16 %v319, %v317
        %v350 = vpack.c.b16 %v320, %v318
        %v351 = vpack.c.b16 %v323, %v321
        %v352 = vpack.c.b16 %v324, %v322
        %v353 = vpack.c.b16 %v327, %v325
        %v354 = vpack.c.b16 %v328, %v326
        %v355 = vpack.c.b16 %v331, %v329
        %v356 = vpack.c.b16 %v332, %v330
        %v357 = vpack.c.b16 %v335, %v333
        %v358 = vpack.c.b16 %v336, %v334
        %v359 = vpack.c.b16 %v339, %v337
        %v360 = vpack.c.b16 %v340, %v338
        %v361 = vpack.c.b16 %v343, %v341
        %v362 = vpack.c.b16 %v344, %v342
        %v363 = vpack.c.b16 %v347, %v345
        %v364 = vpack.c.b16 %v348, %v346
        %381 = vmatprep.subr.bf16.mxu0 %v350
        %382 = vmatpush1.bf16.msra.mxu0 %v349
        %383 = vmatprep.subr.bf16.mxu0 %v352
        %384 = vmatpush1.bf16.msra.mxu0 %v351
        %385 = vmatprep.subr.bf16.mxu0 %v354
        %386 = vmatpush1.bf16.msra.mxu0 %v353
        %387 = vmatprep.subr.bf16.mxu0 %v356
        %388 = vmatpush1.bf16.msra.mxu0 %v355
        %389 = vmatprep.subr.bf16.mxu0 %v358
        %390 = vmatpush1.bf16.msra.mxu0 %v357
        %391 = vmatprep.subr.bf16.mxu0 %v360
        %392 = vmatpush1.bf16.msra.mxu0 %v359
        %393 = vmatprep.subr.bf16.mxu0 %v362
        %394 = vmatpush1.bf16.msra.mxu0 %v361
        %395 = vmatprep.subr.bf16.mxu0 %v364
        %396 = vmatpush1.bf16.msra.mxu0 %v363
        %397 = vmatprep.subr.bf16.mxu0 0
        %398 = vmatpush1.bf16.msra.mxu0 0
        %399 = vmatprep.subr.bf16.mxu0 0
        %400 = vmatpush1.bf16.msra.mxu0 0
        %401 = vmatprep.subr.bf16.mxu0 0
        %402 = vmatpush1.bf16.msra.mxu0 0
        %403 = vmatprep.subr.bf16.mxu0 0
        %404 = vmatpush1.bf16.msra.mxu0 0
        %405 = vmatprep.subr.bf16.mxu0 0
        %406 = vmatpush1.bf16.msra.mxu0 0
        %407 = vmatprep.subr.bf16.mxu0 0
        %408 = vmatpush1.bf16.msra.mxu0 0
        %409 = vmatprep.subr.bf16.mxu0 0
        %410 = vmatpush1.bf16.msra.mxu0 0
        %411 = vmatprep.subr.bf16.mxu0 0
        %412 = vmatpush1.bf16.msra.mxu0 0
        %413 = vmatprep.mubr.bf16.mxu0 0
        %414 = vmatmul.mubr.bf16.gmra.mrb[0].mxu0 %v285
        %v415 = vpop.f32.mrb[0].mxu0
        %v416 = vadd.f32 0.0, %v415
        %v417 = vpop.f32.mrb[0].mxu0
        %v418 = vadd.f32 0.0, %v417
        %v419 = vpop.f32.mrb[0].mxu0
        %v420 = vadd.f32 0.0, %v419
        %v421 = vpop.f32.mrb[0].mxu0
        %v422 = vadd.f32 0.0, %v421
        %423 = vmatprep.mubr.bf16.mxu0 0
        %424 = vmatmul.mubr.bf16.gmra.mrb[0].mxu0 %v286
        %v425 = vpop.f32.mrb[0].mxu0
        %v426 = vadd.f32 0.0, %v425
        %v427 = vpop.f32.mrb[0].mxu0
        %v428 = vadd.f32 0.0, %v427
        %v429 = vpop.f32.mrb[0].mxu0
        %v430 = vadd.f32 0.0, %v429
        %v431 = vpop.f32.mrb[0].mxu0
        %v432 = vadd.f32 0.0, %v431
        %433 = vmatprep.mubr.bf16.mxu0 0
        %434 = vmatmul.mubr.bf16.gmra.mrb[0].mxu0 %v287
        %v435 = vpop.f32.mrb[0].mxu0
        %v436 = vadd.f32 0.0, %v435
        %v437 = vpop.f32.mrb[0].mxu0
        %v438 = vadd.f32 0.0, %v437
        %v439 = vpop.f32.mrb[0].mxu0
        %v440 = vadd.f32 0.0, %v439
        %v441 = vpop.f32.mrb[0].mxu0
        %v442 = vadd.f32 0.0, %v441
        %443 = vmatprep.mubr.bf16.mxu0 0
        %444 = vmatmul.mubr.bf16.gmra.mrb[0].mxu0 %v288
        %v445 = vpop.f32.mrb[0].mxu0
        %v446 = vadd.f32 0.0, %v445
        %v447 = vpop.f32.mrb[0].mxu0
        %v448 = vadd.f32 0.0, %v447
        %v449 = vpop.f32.mrb[0].mxu0
        %v450 = vadd.f32 0.0, %v449
        %v451 = vpop.f32.mrb[0].mxu0
        %v452 = vadd.f32 0.0, %v451
        %453 = vmatprep.mubr.bf16.mxu0 0
        %454 = vmatmul.mubr.bf16.gmra.mrb[0].mxu0 %v289
        %v455 = vpop.f32.mrb[0].mxu0
        %v456 = vadd.f32 0.0, %v455
        %v457 = vpop.f32.mrb[0].mxu0
        %v458 = vadd.f32 0.0, %v457
        %v459 = vpop.f32.mrb[0].mxu0
        %v460 = vadd.f32 0.0, %v459
        %v461 = vpop.f32.mrb[0].mxu0
        %v462 = vadd.f32 0.0, %v461
        %463 = vmatprep.mubr.bf16.mxu0 0
        %464 = vmatmul.mubr.bf16.gmra.mrb[0].mxu0 %v290
        %v465 = vpop.f32.mrb[0].mxu0
        %v466 = vadd.f32 0.0, %v465
        %v467 = vpop.f32.mrb[0].mxu0
        %v468 = vadd.f32 0.0, %v467
        %v469 = vpop.f32.mrb[0].mxu0
        %v470 = vadd.f32 0.0, %v469
        %v471 = vpop.f32.mrb[0].mxu0
        %v472 = vadd.f32 0.0, %v471
        %473 = vmatprep.mubr.bf16.mxu0 0
        %474 = vmatmul.mubr.bf16.gmra.mrb[0].mxu0 %v291
        %v475 = vpop.f32.mrb[0].mxu0
        %v476 = vadd.f32 0.0, %v475
        %v477 = vpop.f32.mrb[0].mxu0
        %v478 = vadd.f32 0.0, %v477
        %v479 = vpop.f32.mrb[0].mxu0
        %v480 = vadd.f32 0.0, %v479
        %v481 = vpop.f32.mrb[0].mxu0
        %v482 = vadd.f32 0.0, %v481
        %483 = vmatprep.mubr.bf16.mxu0 0
        %484 = vmatmul.mubr.bf16.gmra.mrb[0].mxu0 %v292
        %v485 = vpop.f32.mrb[0].mxu0
        %v486 = vadd.f32 0.0, %v485
        %v487 = vpop.f32.mrb[0].mxu0
        %v488 = vadd.f32 0.0, %v487
        %v489 = vpop.f32.mrb[0].mxu0
        %v490 = vadd.f32 0.0, %v489
        %v491 = vpop.f32.mrb[0].mxu0
        %v492 = vadd.f32 0.0, %v491
        %493 = vdwg.mxu0
        %v494 = vmul.f32 %v416, %v418
        %v495 = vmul.f32 %v420, %v422
        %v496 = vmul.f32 %v426, %v428
        %v497 = vmul.f32 %v430, %v432
        %v498 = vmul.f32 %v436, %v438
        %v499 = vmul.f32 %v440, %v442
        %v500 = vmul.f32 %v446, %v448
        %v501 = vmul.f32 %v450, %v452
        %v502 = vmul.f32 %v456, %v458
        %v503 = vmul.f32 %v460, %v462
        %v504 = vmul.f32 %v466, %v468
        %v505 = vmul.f32 %v470, %v472
        %v506 = vmul.f32 %v476, %v478
        %v507 = vmul.f32 %v480, %v482
        %v508 = vmul.f32 %v486, %v488
        %v509 = vmul.f32 %v490, %v492
        %v510 = vld [vmem:[#allocation7] sm:$0xff]
        %v511 = vld [vmem:[#allocation7 + $0x8] sm:$0xff]
        %v512 = vld [vmem:[#allocation7 + $0x10] sm:$0xff]
        %v513 = vld [vmem:[#allocation7 + $0x18] sm:$0xff]
        %v514 = vld [vmem:[#allocation7 + $0x20] sm:$0xff]
        %v515 = vld [vmem:[#allocation7 + $0x28] sm:$0xff]
        %v516 = vld [vmem:[#allocation7 + $0x30] sm:$0xff]
        %v517 = vld [vmem:[#allocation7 + $0x38] sm:$0xff]
        %v518 = vld [vmem:[#allocation7 + $0x40] sm:$0xff]
        %v519 = vld [vmem:[#allocation7 + $0x48] sm:$0xff]
        %v520 = vld [vmem:[#allocation7 + $0x50] sm:$0xff]
        %v521 = vld [vmem:[#allocation7 + $0x58] sm:$0xff]
        %v522 = vld [vmem:[#allocation7 + $0x60] sm:$0xff]
        %v523 = vld [vmem:[#allocation7 + $0x68] sm:$0xff]
        %v524 = vld [vmem:[#allocation7 + $0x70] sm:$0xff]
        %v525 = vld [vmem:[#allocation7 + $0x78] sm:$0xff]
        %526 = vmatprep.subr.mxu0 0.0
        %527 = vmatpush1.msra.mxu0 %v510
        %528 = vmatprep.subr.mxu0 0.0
        %529 = vmatpush1.msra.mxu0 %v511
        %530 = vmatprep.subr.mxu0 0.0
        %531 = vmatpush1.msra.mxu0 %v512
        %532 = vmatprep.subr.mxu0 0.0
        %533 = vmatpush1.msra.mxu0 %v513
        %534 = vmatprep.subr.mxu0 0.0
        %535 = vmatpush1.msra.mxu0 %v514
        %536 = vmatprep.subr.mxu0 0.0
        %537 = vmatpush1.msra.mxu0 %v515
        %538 = vmatprep.subr.mxu0 0.0
        %539 = vmatpush1.msra.mxu0 %v516
        %540 = vmatprep.subr.mxu0 0.0
        %541 = vmatpush1.msra.mxu0 %v517
        %542 = vmatprep.subr.mxu0 0.0
        %543 = vmatpush1.msra.mxu0 %v518
        %544 = vmatprep.subr.mxu0 0.0
        %545 = vmatpush1.msra.mxu0 %v519
        %546 = vmatprep.subr.mxu0 0.0
        %547 = vmatpush1.msra.mxu0 %v520
        %548 = vmatprep.subr.mxu0 0.0
        %549 = vmatpush1.msra.mxu0 %v521
        %550 = vmatprep.subr.mxu0 0.0
        %551 = vmatpush1.msra.mxu0 %v522
        %552 = vmatprep.subr.mxu0 0.0
        %553 = vmatpush1.msra.mxu0 %v523
        %554 = vmatprep.subr.mxu0 0.0
        %555 = vmatpush1.msra.mxu0 %v524
        %556 = vmatprep.subr.mxu0 0.0
        %557 = vmatpush1.msra.mxu0 %v525
        %558 = vmatprep.subr.mxu0 0.0
        %559 = vmatpush1.msra.mxu0 0.0
        %560 = vmatprep.subr.mxu0 0.0
        %561 = vmatpush1.msra.mxu0 0.0
        %562 = vmatprep.subr.mxu0 0.0
        %563 = vmatpush1.msra.mxu0 0.0
        %564 = vmatprep.subr.mxu0 0.0
        %565 = vmatpush1.msra.mxu0 0.0
        %566 = vmatprep.subr.mxu0 0.0
        %567 = vmatpush1.msra.mxu0 0.0
        %568 = vmatprep.subr.mxu0 0.0
        %569 = vmatpush1.msra.mxu0 0.0
        %570 = vmatprep.subr.mxu0 0.0
        %571 = vmatpush1.msra.mxu0 0.0
        %572 = vmatprep.subr.mxu0 0.0
        %573 = vmatpush1.msra.mxu0 0.0
        %574 = vmatprep.subr.mxu0 0.0
        %575 = vmatpush1.msra.mxu0 0.0
        %576 = vmatprep.subr.mxu0 0.0
        %577 = vmatpush1.msra.mxu0 0.0
        %578 = vmatprep.subr.mxu0 0.0
        %579 = vmatpush1.msra.mxu0 0.0
        %580 = vmatprep.subr.mxu0 0.0
        %581 = vmatpush1.msra.mxu0 0.0
        %582 = vmatprep.subr.mxu0 0.0
        %583 = vmatpush1.msra.mxu0 0.0
        %584 = vmatprep.subr.mxu0 0.0
        %585 = vmatpush1.msra.mxu0 0.0
        %586 = vmatprep.subr.mxu0 0.0
        %587 = vmatpush1.msra.mxu0 0.0
        %588 = vmatprep.subr.mxu0 0.0
        %589 = vmatpush1.msra.mxu0 0.0
        %590 = vmatprep.mubr.f32.mxu0 0.0
        %591 = vmatmul.mubr.f32.gmra.mrb[0].mxu0 %v494
        %v592 = vpop.f32.mrb[0].mxu0
        %v593 = vadd.f32 0.0, %v592
        %v594 = vpop.f32.mrb[0].mxu0
        %595 = vmatprep.mubr.f32.mxu0 0.0
        %596 = vmatmul.mubr.f32.gmra.mrb[0].mxu0 %v495
        %v597 = vpop.f32.mrb[0].mxu0
        %v598 = vadd.f32 0.0, %v597
        %v599 = vpop.f32.mrb[0].mxu0
        %600 = vmatprep.mubr.f32.mxu0 0.0
        %601 = vmatmul.mubr.f32.gmra.mrb[0].mxu0 %v496
        %v602 = vpop.f32.mrb[0].mxu0
        %v603 = vadd.f32 0.0, %v602
        %v604 = vpop.f32.mrb[0].mxu0
        %605 = vmatprep.mubr.f32.mxu0 0.0
        %606 = vmatmul.mubr.f32.gmra.mrb[0].mxu0 %v497
        %v607 = vpop.f32.mrb[0].mxu0
        %v608 = vadd.f32 0.0, %v607
        %v609 = vpop.f32.mrb[0].mxu0
        %610 = vmatprep.mubr.f32.mxu0 0.0
        %611 = vmatmul.mubr.f32.gmra.mrb[0].mxu0 %v498
        %v612 = vpop.f32.mrb[0].mxu0
        %v613 = vadd.f32 0.0, %v612
        %v614 = vpop.f32.mrb[0].mxu0
        %615 = vmatprep.mubr.f32.mxu0 0.0
        %616 = vmatmul.mubr.f32.gmra.mrb[0].mxu0 %v499
        %v617 = vpop.f32.mrb[0].mxu0
        %v618 = vadd.f32 0.0, %v617
        %v619 = vpop.f32.mrb[0].mxu0
        %620 = vmatprep.mubr.f32.mxu0 0.0
        %621 = vmatmul.mubr.f32.gmra.mrb[0].mxu0 %v500
        %v622 = vpop.f32.mrb[0].mxu0
        %v623 = vadd.f32 0.0, %v622
        %v624 = vpop.f32.mrb[0].mxu0
        %625 = vmatprep.mubr.f32.mxu0 0.0
        %626 = vmatmul.mubr.f32.gmra.mrb[0].mxu0 %v501
        %v627 = vpop.f32.mrb[0].mxu0
        %v628 = vadd.f32 0.0, %v627
        %v629 = vpop.f32.mrb[0].mxu0
        %630 = vmatprep.mubr.f32.mxu0 0.0
        %631 = vmatmul.mubr.f32.gmra.mrb[0].mxu0 %v502
        %v632 = vpop.f32.mrb[0].mxu0
        %v633 = vadd.f32 0.0, %v632
        %v634 = vpop.f32.mrb[0].mxu0
        %635 = vmatprep.mubr.f32.mxu0 0.0
        %636 = vmatmul.mubr.f32.gmra.mrb[0].mxu0 %v503
        %v637 = vpop.f32.mrb[0].mxu0
        %v638 = vadd.f32 0.0, %v637
        %v639 = vpop.f32.mrb[0].mxu0
        %640 = vmatprep.mubr.f32.mxu0 0.0
        %641 = vmatmul.mubr.f32.gmra.mrb[0].mxu0 %v504
        %v642 = vpop.f32.mrb[0].mxu0
        %v643 = vadd.f32 0.0, %v642
        %v644 = vpop.f32.mrb[0].mxu0
        %645 = vmatprep.mubr.f32.mxu0 0.0
        %646 = vmatmul.mubr.f32.gmra.mrb[0].mxu0 %v505
        %v647 = vpop.f32.mrb[0].mxu0
        %v648 = vadd.f32 0.0, %v647
        %v649 = vpop.f32.mrb[0].mxu0
        %650 = vmatprep.mubr.f32.mxu0 0.0
        %651 = vmatmul.mubr.f32.gmra.mrb[0].mxu0 %v506
        %v652 = vpop.f32.mrb[0].mxu0
        %v653 = vadd.f32 0.0, %v652
        %v654 = vpop.f32.mrb[0].mxu0
        %655 = vmatprep.mubr.f32.mxu0 0.0
        %656 = vmatmul.mubr.f32.gmra.mrb[0].mxu0 %v507
        %v657 = vpop.f32.mrb[0].mxu0
        %v658 = vadd.f32 0.0, %v657
        %v659 = vpop.f32.mrb[0].mxu0
        %660 = vmatprep.mubr.f32.mxu0 0.0
        %661 = vmatmul.mubr.f32.gmra.mrb[0].mxu0 %v508
        %v662 = vpop.f32.mrb[0].mxu0
        %v663 = vadd.f32 0.0, %v662
        %v664 = vpop.f32.mrb[0].mxu0
        %665 = vmatprep.mubr.f32.mxu0 0.0
        %666 = vmatmul.mubr.f32.gmra.mrb[0].mxu0 %v509
        %v667 = vpop.f32.mrb[0].mxu0
        %v668 = vadd.f32 0.0, %v667
        %v669 = vpop.f32.mrb[0].mxu0
        %670 = vdwg.mxu0
        %671 = vst [vmem:[%s217] sm:$0xff] %v593
        %672 = vst [vmem:[%s217 + $0x8] sm:$0xff] %v598
        %673 = vst [vmem:[%s217 + $0x10] sm:$0xff] %v603
        %674 = vst [vmem:[%s217 + $0x18] sm:$0xff] %v608
        %675 = vst [vmem:[%s217 + $0x20] sm:$0xff] %v613
        %676 = vst [vmem:[%s217 + $0x28] sm:$0xff] %v618
        %677 = vst [vmem:[%s217 + $0x30] sm:$0xff] %v623
        %678 = vst [vmem:[%s217 + $0x38] sm:$0xff] %v628
        %679 = vst [vmem:[%s217 + $0x40] sm:$0xff] %v633
        %680 = vst [vmem:[%s217 + $0x48] sm:$0xff] %v638
        %681 = vst [vmem:[%s217 + $0x50] sm:$0xff] %v643
        %682 = vst [vmem:[%s217 + $0x58] sm:$0xff] %v648
        %683 = vst [vmem:[%s217 + $0x60] sm:$0xff] %v653
        %684 = vst [vmem:[%s217 + $0x68] sm:$0xff] %v658
        %685 = vst [vmem:[%s217 + $0x70] sm:$0xff] %v663
        %686 = vst [vmem:[%s217 + $0x78] sm:$0xff] %v668
        %s687 = sand.u32 %s97, 1
        %s688 = scalar_lea.sflag [#allocation4], %s687
        %s689 = sand.u32 %s97, 1
        %s690 = smul.addr %s689, 128
        %s691 = scalar_lea.vmem [#allocation8], %s690
        // Predicated region
        $region45: #{tpu_custom_call.1} parent=31 // pred_check
          %p692 = pneg %p107
        $region46: #{tpu_custom_call.1} parent=31 // pred_check_branch
          %694 = sbr.rel (%p692) target = $region48
        $region47: #{tpu_custom_call.1} parent=31 // pred_region
          %s695 = smul.u32 16, %s21
          %s697 = ssub.s32 2048, 2048
          %698 = vsyncadd %s688, %s697
          %s699 = smul.addr %s695, 128
          %s700 = scalar_lea.hbm %s3, %s699
          %s701 = sshll.u32 %s691, 4
          %s702 = int_to_ptr.vmem [resolvable:$true] %s701
          %707 = dma.vmem_to_hbm [thread:$0]  %s702, 2048, %s700, %s688, 128, 128, 8
        $region48: #{tpu_custom_call.1} parent=31 // pred_fallthru
          _
      $region32: #{tpu_custom_call.1} parent=5 // pred_fallthru
        _
      %p708 = scmp.le.s32.totalorder 2, %s16
      // Predicated region
      $region49: #{tpu_custom_call.1} parent=5 // pred_check
        %p709 = pneg %p708
      $region50: #{tpu_custom_call.1} parent=5 // pred_check_branch
        %711 = sbr.rel (%p709) target = $region52
      $region51: #{tpu_custom_call.1} parent=5 // pred_region
        %s712 = ssub.s32 %s16, 2
        // Predicated region
        $region53: #{tpu_custom_call.1} parent=51 // pred_check
          %p713 = pneg %p113
        $region54: #{tpu_custom_call.1} parent=51 // pred_check_branch
          %715 = sbr.rel (%p713) target = $region56
        $region55: #{tpu_custom_call.1} parent=51 // pred_region
          %s716 = sand.u32 %s98, 1
          %s717 = scalar_lea.sflag [#allocation4], %s716
          %s718 = sand.u32 %s98, 1
          %s719 = smul.addr %s718, 128
          %s720 = scalar_lea.vmem [#allocation8], %s719
          %721 = dma.done %s717, 2048
        $region56: #{tpu_custom_call.1} parent=51 // pred_fallthru
          _
      $region52: #{tpu_custom_call.1} parent=5 // pred_fallthru
        _
    $region6: #{tpu_custom_call.1} parent=1 // loop_footer
      %s20 = sadd.s32 1, %s16
    $region7: #{tpu_custom_call.1} parent=1 // loop_footer_branch
      %15 = sbr.rel target = $region3
    $region8: #{tpu_custom_call.1} parent=1 // loop_exit
      _
    %722 = vsyncpa [#allocation3], 1
    %s723 = scalar_lea.sflag [#allocation3], 1
    %724 = vsyncpa %s723, 1
    %725 = vsyncpa [#allocation6], 1
    %726 = vsyncpa [#allocation4], 1
    %s727 = scalar_lea.sflag [#allocation4], 1
    %728 = vsyncpa %s727, 1

</llo_original>
